<compile_context>
chip_gen: v7x
topology: tpu7x:2x2x1
jax: 0.10.0
libtpu: 0.0.40
codegen_flags: <defaults>
</compile_context>

<pallas_src>
import jax
import jax.numpy as jnp
from jax.experimental import pallas as pl
from jax.experimental.pallas import tpu as pltpu

# Gridless whole-slab copy only while input+output comfortably fit the scoped
# VMEM budget on every generation (v5e default scoped limit is 16 MiB and both
# buffers are live, so gate at 2 MiB per slab => 4 MiB resident, large margin).
_GRIDLESS_MAX_BYTES = 2 * 1024 * 1024
# Target ~2 MiB per pipelined tile on the gridded path: measured mem-bound
# copies reach ~85% of HBM roofline at >=512-row lane-dense tiles, and
# 2 tiles x 2 buffers x 2 MiB = 8 MiB stays inside every default scoped limit.
_TILE_TARGET_BYTES = 2 * 1024 * 1024


def _base_vae_forward_kernel(x_ref, o_ref):
    # BaseVAE.forward is @abstractmethod (body = `pass`) -> identity.
    # TODO(synk): a concrete subclass (e.g. DIPVAE) would insert its
    #             encoder/decoder compute here: MXU tiles 256-aligned on
    #             v6e/v7x (128-aligned on v5e), reduction axis last in the grid
    #             marked "arbitrary", f32 VMEM accumulator scratch with pl.when
    #             init/finalize, and tile budgets re-derived for v7x's 64 MiB
    #             VMEM / dual TensorCores.
    o_ref[...] = x_ref[...]


def _as_slab(x: jax.Array) -> jax.Array:
    """Present `x` as a lane-dense 2D slab without any pad/unpad HBM passes."""
    n = x.size
    # Widest lane dim that divides the true element count (rows stay >= 1).
    for lanes in (1024, 512, 256, 128):
        if n % lanes == 0 and n // lanes >= 1:
            return x.reshape(-1, lanes)
    # Ragged element count: keep the natural trailing dim (full-dim blocks are
    # exempt from the (8,128) rule); no padding ops, stores may be masked but
    # we never touch the data twice.
    if x.ndim >= 2:
        return x.reshape(-1, x.shape[-1])
    return x.reshape(1, -1)


def _copy_gridless(slab: jax.Array) -> jax.Array:
    """Single-invocation whole-slab copy for small inputs."""
    nbytes = slab.size * slab.dtype.itemsize
    return pl.pallas_call(
        _base_vae_forward_kernel,
        out_shape=jax.ShapeDtypeStruct(slab.shape, slab.dtype),
        in_specs=[pl.BlockSpec(memory_space=pltpu.MemorySpace.VMEM)],
        out_specs=pl.BlockSpec(memory_space=pltpu.MemorySpace.VMEM),
        cost_estimate=pl.CostEstimate(
            flops=0, transcendentals=0, bytes_accessed=2 * nbytes),
    )(slab)


def _copy_gridded(slab: jax.Array) -> jax.Array:
    """Pipelined, tiled copy for activation-sized inputs (VMEM-safe)."""
    rows, lanes = slab.shape
    itemsize = slab.dtype.itemsize
    row_bytes = lanes * itemsize
    # ~2 MiB tiles, row count a multiple of 8 (sublane constraint), >= 8.
    tile_rows = (_TILE_TARGET_BYTES // row_bytes) // 8 * 8
    tile_rows = max(8, min(tile_rows, (rows // 8) * 8 if rows >= 8 else 8))
    grid = (pl.cdiv(rows, tile_rows),)
    nbytes = slab.size * itemsize
    return pl.pallas_call(
        _base_vae_forward_kernel,
        out_shape=jax.ShapeDtypeStruct(slab.shape, slab.dtype),
        grid=grid,
        in_specs=[pl.BlockSpec((tile_rows, lanes), lambda i: (i, 0))],
        out_specs=pl.BlockSpec((tile_rows, lanes), lambda i: (i, 0)),
        compiler_params=pltpu.CompilerParams(
            # Independent row tiles: both v7x TensorCores split the grid.
            dimension_semantics=("parallel",),
        ),
        cost_estimate=pl.CostEstimate(
            flops=0, transcendentals=0, bytes_accessed=2 * nbytes),
    )(slab)


@jax.jit
def base_vae_forward(x: jax.Array) -> jax.Array:
    """Pass-through 'forward' for the abstract BaseVAE, as a Pallas kernel."""
    orig_shape = x.shape
    slab = _as_slab(x)  # reshape of contiguous data: bitcast view, no HBM pass
    if slab.size * slab.dtype.itemsize <= _GRIDLESS_MAX_BYTES:
        out = _copy_gridless(slab)
    else:
        out = _copy_gridded(slab)
    return out.reshape(orig_shape)


# TODO(synk): encode(), decode(), sample(), generate(), loss_function() raise
#             NotImplementedError in BaseVAE — nothing to translate.


if __name__ == "__main__":
    key = jax.random.PRNGKey(0)

    # Small VAE-style NCHW input (batch=2, C=4, 16x16) -> (2,1024) slab,
    # gridless path, fully unmasked vector stores.
    x = jax.random.normal(key, (2, 4, 16, 16), dtype=jnp.float32)
    y = jax.block_until_ready(base_vae_forward(x))
    assert y.shape == x.shape and y.dtype == x.dtype
    assert bool(jnp.allclose(y, x))

    # Activation-sized input (4 MiB) exercises the size-gated gridded path:
    # (1024, 1024) slab, 512-row tiles, grid=(2,), "parallel" axis.
    x_big = jax.random.normal(key, (64, 4, 64, 64), dtype=jnp.float32)
    y_big = jax.block_until_ready(base_vae_forward(x_big))
    assert y_big.shape == x_big.shape and y_big.dtype == x_big.dtype
    assert bool(jnp.allclose(y_big, x_big))

    print("KERNEL_OK")
</pallas_src>

<mosaic_0001>
module attributes {stable_mosaic.version = 11 : i64} {
  func.func @_base_vae_forward_kernel(%arg0: memref<2x1024xf32, #tpu.memory_space<vmem>>, %arg1: memref<2x1024xf32, #tpu.memory_space<vmem>>) attributes {dimension_semantics = [], scalar_prefetch = 0 : i64, scratch_operands = 0 : i64, tpu.core_type = #tpu.core_type<tc>} {
    %c0 = arith.constant 0 : index
    %c0_0 = arith.constant 0 : index
    %0 = vector.load %arg0[%c0, %c0_0] : memref<2x1024xf32, #tpu.memory_space<vmem>>, vector<2x1024xf32>
    %c0_1 = arith.constant 0 : index
    %c0_2 = arith.constant 0 : index
    %1 = vector.load %arg1[%c0_1, %c0_2] : memref<2x1024xf32, #tpu.memory_space<vmem>>, vector<2x1024xf32>
    tpu.vector_store %arg1[%c0_1, %c0_2], %0 {strides = array<i32>} : memref<2x1024xf32, #tpu.memory_space<vmem>>, vector<2x1024xf32>,
    return
  }
}

</mosaic_0001>

<llo_original>
// kernel: base_vae_forward.1
$region0: #{base_vae_forward.1}
  #allocation0 [shape = 'u32[]', space=smem, size = 0x4, offset = 0x4, fixed_abs, tag = 'smem constant byte address 0x4 - core index']
  #allocation1 [shape = 'u32[144,128]{1,0:T(1,128)}', space=vmem, size = 0x12000, scoped, tag = 'internal scratch']
  %s0 = inlined_call_operand.vmem [shape: f32[2,1024], index: 0, kind: input, shape index: {}]
  %s1 = inlined_call_operand.vmem [shape: f32[2,1024], index: 1, kind: output, shape index: {}]
  %s2 = sld [smem:[#allocation0]]
  $region14: #{base_vae_forward.1} parent=0
    _
  %s4 = ssub.s32 1, %s2
  %s5 = scalar_select 0, %s4, %s2
  // Predicated region
  $region2: #{base_vae_forward.1} parent=0 // pred_check
    _
  $region3: #{base_vae_forward.1} parent=0 // pred_check_branch
    %7 = sbr.rel (0) target = $region5
  $region4: #{base_vae_forward.1} parent=0 // pred_region
    _
  $region5: #{base_vae_forward.1} parent=0 // pred_fallthru
    _
  %v8 = vld [vmem:[%s0] sm:$0xff]
  %v9 = vld [vmem:[%s0 + $0x8] sm:$0xff]
  %10 = vst [vmem:[%s1] sm:$0xff] %v8
  %11 = vst [vmem:[%s1 + $0x8] sm:$0xff] %v9
  // Predicated region
  $region6: #{base_vae_forward.1} parent=0 // pred_check
    _
  $region7: #{base_vae_forward.1} parent=0 // pred_check_branch
    %13 = sbr.rel (0) target = $region9
  $region8: #{base_vae_forward.1} parent=0 // pred_region
    _
  $region9: #{base_vae_forward.1} parent=0 // pred_fallthru
    _
  // Predicated region
  $region10: #{base_vae_forward.1} parent=0 // pred_check
    _
  $region11: #{base_vae_forward.1} parent=0 // pred_check_branch
    %15 = sbr.rel (0) target = $region13
  $region12: #{base_vae_forward.1} parent=0 // pred_region
    _
  $region13: #{base_vae_forward.1} parent=0 // pred_fallthru
    _

</llo_original>
